<compile_context>
chip_gen: v7x
topology: tpu7x:2x2x1
jax: 0.10.0
libtpu: 0.0.40
codegen_flags: <defaults>
</compile_context>

<pallas_src>
import jax
import jax.numpy as jnp
from jax.experimental import pallas as pl
from jax.experimental.pallas import tpu as pltpu

EPS = 1e-5  # PyTorch nn.LayerNorm default


# ---------------------------------------------------------------------------
# Row-tile sizing: double-buffered (TM, D) input + (TM, Dout) output tiles plus
# resident bf16 weights must fit a conservative VMEM budget (valid on v5e/v6e
# 128 MiB and v7x 64 MiB physical VMEM with default scoped limits).
# ---------------------------------------------------------------------------
def _choose_tm(R, D, Dout, bytes_budget=24 * 1024 * 1024):
    resident = D * Dout * 2 + (2 * D + Dout) * 4          # bf16 W + f32 params
    per_row = 2 * (D * 4 + Dout * 4)                       # 2 bufs in + 2 bufs out
    tm = max(8, (bytes_budget - resident) // per_row)
    tm = min(tm, R, 1024)
    tm = max(8, (tm // 8) * 8)                             # sublane multiple
    while tm > 8 and R % tm != 0:                          # keep grid exact
        tm -= 8
    if R % tm != 0:
        tm = R                                             # full-array fallback
    return tm


# ---------------------------------------------------------------------------
# Fused PreNorm(Linear) kernel: LayerNorm the row tile in VMEM, then matmul
# against the resident weight and add bias — single HBM read of x, single
# HBM write of y.
# ---------------------------------------------------------------------------
def _prenorm_linear_kernel(x_ref, g_ref, b_ref, w_ref, bl_ref, o_ref):
    x = x_ref[...].astype(jnp.float32)                     # [TM, D]
    # One-pass statistics (two XLU reductions): var = E[x^2] - mean^2.
    mean = jnp.mean(x, axis=-1, keepdims=True)             # [TM, 1]
    mean_sq = jnp.mean(x * x, axis=-1, keepdims=True)      # [TM, 1]
    var = mean_sq - mean * mean                            # biased var (PyTorch)
    inv = jax.lax.rsqrt(var + EPS)
    y = (x - mean) * inv
    y = y * g_ref[...].astype(jnp.float32) + b_ref[...].astype(jnp.float32)
    # bf16 operands into the MXU, f32 accumulation.
    acc = jnp.dot(y.astype(jnp.bfloat16), w_ref[...],
                  preferred_element_type=jnp.float32)      # [TM, Dout]
    acc = acc + bl_ref[...].astype(jnp.float32)
    o_ref[...] = acc.astype(o_ref.dtype)


def pre_norm_linear(x, gamma, beta, w, b, *, out_dtype=None):
    """Fused PreNorm with fn = Linear(D, Dout): [B, N, D] -> [B, N, Dout]."""
    B, N, D = x.shape
    Dout = w.shape[1]
    R = B * N
    x2d = x.reshape(R, D)
    out_dtype = out_dtype or x.dtype

    TM = _choose_tm(R, D, Dout)
    grid = (pl.cdiv(R, TM),)

    w_bf16 = w.astype(jnp.bfloat16)   # halves weight DMA bytes, MXU-native
    bytes_accessed = (R * D * x2d.dtype.itemsize           # x
                      + D * Dout * 2                       # W (bf16)
                      + R * Dout * jnp.dtype(out_dtype).itemsize  # y
                      + (2 * D + Dout) * 4)                # gamma/beta/bias
    cost = pl.CostEstimate(flops=2 * R * D * Dout,
                           transcendentals=R,              # one rsqrt per row
                           bytes_accessed=bytes_accessed)

    out2d = pl.pallas_call(
        _prenorm_linear_kernel,
        out_shape=jax.ShapeDtypeStruct((R, Dout), out_dtype),
        grid=grid,
        in_specs=[
            pl.BlockSpec((TM, D), lambda i: (i, 0)),       # x tile (pipelined)
            pl.BlockSpec((1, D), lambda i: (0, 0)),        # gamma (resident)
            pl.BlockSpec((1, D), lambda i: (0, 0)),        # beta  (resident)
            pl.BlockSpec((D, Dout), lambda i: (0, 0)),     # W     (resident)
            pl.BlockSpec((1, Dout), lambda i: (0, 0)),     # bias  (resident)
        ],
        out_specs=pl.BlockSpec((TM, Dout), lambda i: (i, 0)),
        compiler_params=pltpu.CompilerParams(
            dimension_semantics=("parallel",),             # 2 TCs on v7x
            vmem_limit_bytes=32 * 1024 * 1024,
        ),
        cost_estimate=cost,
    )(x2d, gamma, beta, w_bf16, b)
    return out2d.reshape(B, N, Dout)


# ---------------------------------------------------------------------------
# Standalone row-tiled LayerNorm kernel — used by the generic PreNorm wrapper
# when the wrapped `fn` is an arbitrary callable (not a plain Linear).
# ---------------------------------------------------------------------------
def _layernorm_kernel(x_ref, g_ref, b_ref, o_ref):
    x = x_ref[...].astype(jnp.float32)
    mean = jnp.mean(x, axis=-1, keepdims=True)
    mean_sq = jnp.mean(x * x, axis=-1, keepdims=True)
    var = mean_sq - mean * mean
    inv = jax.lax.rsqrt(var + EPS)
    y = (x - mean) * inv
    y = y * g_ref[...].astype(jnp.float32) + b_ref[...].astype(jnp.float32)
    o_ref[...] = y.astype(o_ref.dtype)


def layernorm_pallas(x2d, gamma, beta):
    R, D = x2d.shape
    TM = _choose_tm(R, D, D)
    return pl.pallas_call(
        _layernorm_kernel,
        out_shape=jax.ShapeDtypeStruct((R, D), x2d.dtype),
        grid=(pl.cdiv(R, TM),),
        in_specs=[
            pl.BlockSpec((TM, D), lambda i: (i, 0)),
            pl.BlockSpec((1, D), lambda i: (0, 0)),
            pl.BlockSpec((1, D), lambda i: (0, 0)),
        ],
        out_specs=pl.BlockSpec((TM, D), lambda i: (i, 0)),
        compiler_params=pltpu.CompilerParams(
            dimension_semantics=("parallel",),
            vmem_limit_bytes=32 * 1024 * 1024,
        ),
    )(x2d, gamma, beta)


def pre_norm(x, gamma, beta, fn, **kwargs):
    """Generic PreNorm: y = fn(LayerNorm(x), **kwargs), fn arbitrary."""
    # TODO(synk): if `fn` is a Linear, prefer the fused pre_norm_linear path.
    B, N, D = x.shape
    normed = layernorm_pallas(x.reshape(B * N, D), gamma, beta).reshape(B, N, D)
    return fn(normed, **kwargs)


if __name__ == "__main__":
    # Small, deterministic example; D/Dout chosen as multiples of 128 so the
    # output last dim is lane-dense (unmasked vector stores).
    B, N, D, Dout = 2, 8, 128, 128

    key = jax.random.PRNGKey(0)
    kx, kg, kb, kw, kbl = jax.random.split(key, 5)
    x = jax.random.normal(kx, (B, N, D), dtype=jnp.float32)

    # Non-trivial affine params to exercise the full LayerNorm path.
    gamma = (1.0 + 0.1 * jax.random.normal(kg, (1, D))).astype(jnp.float32)
    beta = (0.05 * jax.random.normal(kb, (1, D))).astype(jnp.float32)

    # fn = Linear(D, Dout), synthetic weights (no checkpoint).
    w = (0.02 * jax.random.normal(kw, (D, Dout))).astype(jnp.float32)
    b_lin = (0.01 * jax.random.normal(kbl, (1, Dout))).astype(jnp.float32)

    # Fused PreNorm + Linear kernel.
    out = pre_norm_linear(x, gamma, beta, w, b_lin)
    out = jax.block_until_ready(out)

    # f32 reference.
    x32 = x.astype(jnp.float32)
    mean = jnp.mean(x32, axis=-1, keepdims=True)
    var = jnp.mean((x32 - mean) ** 2, axis=-1, keepdims=True)
    ref_norm = (x32 - mean) * jax.lax.rsqrt(var + EPS) * gamma[0] + beta[0]
    ref = (ref_norm.reshape(B * N, D) @ w + b_lin[0]).reshape(B, N, Dout)
    # bf16 matmul operands (f32 accumulate) -> slightly looser tolerance.
    assert jnp.allclose(out, ref, atol=3e-2, rtol=3e-2), "fused kernel mismatch"

    # Also check the standalone LayerNorm (generic PreNorm path).
    ln = jax.block_until_ready(layernorm_pallas(x.reshape(B * N, D), gamma, beta))
    assert jnp.allclose(ln.reshape(B, N, D), ref_norm, atol=1e-4, rtol=1e-4), \
        "layernorm kernel mismatch"

    print("KERNEL_OK")
</pallas_src>

<mosaic_0001>
module attributes {stable_mosaic.version = 11 : i64} {
  func.func @_prenorm_linear_kernel(%arg0: i32, %arg1: memref<16x128xf32, #tpu.memory_space<vmem>>, %arg2: memref<1x128xf32, #tpu.memory_space<vmem>>, %arg3: memref<1x128xf32, #tpu.memory_space<vmem>>, %arg4: memref<128x128xbf16, #tpu.memory_space<vmem>>, %arg5: memref<1x128xf32, #tpu.memory_space<vmem>>, %arg6: memref<16x128xf32, #tpu.memory_space<vmem>>) attributes {dimension_semantics = [#tpu.dimension_semantics<parallel>], iteration_bounds = array<i64: 1>, scalar_prefetch = 0 : i64, scratch_operands = 0 : i64, tpu.core_type = #tpu.core_type<tc>, window_params = [{transform_indices = @transform_0, window_bounds = array<i64: 16, 128>}, {pipeline_mode = #tpu.pipeline_mode<synchronous>, transform_indices = @transform_1, window_bounds = array<i64: 1, 128>}, {pipeline_mode = #tpu.pipeline_mode<synchronous>, transform_indices = @transform_2, window_bounds = array<i64: 1, 128>}, {pipeline_mode = #tpu.pipeline_mode<synchronous>, transform_indices = @transform_3, window_bounds = array<i64: 128, 128>}, {pipeline_mode = #tpu.pipeline_mode<synchronous>, transform_indices = @transform_4, window_bounds = array<i64: 1, 128>}, {transform_indices = @transform_5, window_bounds = array<i64: 16, 128>}]} {
    %c0 = arith.constant 0 : index
    %c0_0 = arith.constant 0 : index
    %0 = vector.load %arg1[%c0, %c0_0] : memref<16x128xf32, #tpu.memory_space<vmem>>, vector<16x128xf32>
    %cst = arith.constant dense<0.000000e+00> : vector<16xf32>
    %1 = vector.multi_reduction <add>, %0, %cst [1] : vector<16x128xf32> to vector<16xf32>
    %2 = vector.shape_cast %1 : vector<16xf32> to vector<16x1xf32>
    %cst_1 = arith.constant 1.280000e+02 : f32
    %3 = vector.broadcast %cst_1 : f32 to vector<16x1xf32>
    %4 = arith.divf %2, %3 : vector<16x1xf32>
    %5 = arith.mulf %0, %0 : vector<16x128xf32>
    %cst_2 = arith.constant dense<0.000000e+00> : vector<16xf32>
    %6 = vector.multi_reduction <add>, %5, %cst_2 [1] : vector<16x128xf32> to vector<16xf32>
    %7 = vector.shape_cast %6 : vector<16xf32> to vector<16x1xf32>
    %cst_3 = arith.constant 1.280000e+02 : f32
    %8 = vector.broadcast %cst_3 : f32 to vector<16x1xf32>
    %9 = arith.divf %7, %8 : vector<16x1xf32>
    %10 = arith.mulf %4, %4 : vector<16x1xf32>
    %11 = arith.subf %9, %10 : vector<16x1xf32>
    %cst_4 = arith.constant 9.99999974E-6 : f32
    %12 = vector.broadcast %cst_4 : f32 to vector<16x1xf32>
    %13 = arith.addf %11, %12 : vector<16x1xf32>
    %14 = math.rsqrt %13 : vector<16x1xf32>
    %15 = vector.broadcast %4 : vector<16x1xf32> to vector<16x128xf32>
    %16 = arith.subf %0, %15 : vector<16x128xf32>
    %17 = vector.broadcast %14 : vector<16x1xf32> to vector<16x128xf32>
    %18 = arith.mulf %16, %17 : vector<16x128xf32>
    %c0_5 = arith.constant 0 : index
    %c0_6 = arith.constant 0 : index
    %19 = vector.load %arg2[%c0_5, %c0_6] : memref<1x128xf32, #tpu.memory_space<vmem>>, vector<1x128xf32>
    %20 = vector.broadcast %19 : vector<1x128xf32> to vector<16x128xf32>
    %21 = arith.mulf %18, %20 : vector<16x128xf32>
    %c0_7 = arith.constant 0 : index
    %c0_8 = arith.constant 0 : index
    %22 = vector.load %arg3[%c0_7, %c0_8] : memref<1x128xf32, #tpu.memory_space<vmem>>, vector<1x128xf32>
    %23 = vector.broadcast %22 : vector<1x128xf32> to vector<16x128xf32>
    %24 = arith.addf %21, %23 : vector<16x128xf32>
    %25 = arith.truncf %24 : vector<16x128xf32> to vector<16x128xbf16>
    %c0_9 = arith.constant 0 : index
    %c0_10 = arith.constant 0 : index
    %26 = vector.load %arg4[%c0_9, %c0_10] : memref<128x128xbf16, #tpu.memory_space<vmem>>, vector<128x128xbf16>
    %cst_11 = arith.constant dense<0.000000e+00> : vector<16x128xf32>
    %27 = tpu.matmul %25, %26, %cst_11 {dimension_numbers = #tpu.dot_dimension_numbers<[1], [0], [0], [1], [0, 0, 1, 1], [], []>} : vector<16x128xbf16>, vector<128x128xbf16>, vector<16x128xf32> -> vector<16x128xf32>
    %c0_12 = arith.constant 0 : index
    %c0_13 = arith.constant 0 : index
    %28 = vector.load %arg5[%c0_12, %c0_13] : memref<1x128xf32, #tpu.memory_space<vmem>>, vector<1x128xf32>
    %29 = vector.broadcast %28 : vector<1x128xf32> to vector<16x128xf32>
    %30 = arith.addf %27, %29 : vector<16x128xf32>
    %c0_14 = arith.constant 0 : index
    %c0_15 = arith.constant 0 : index
    %31 = vector.load %arg6[%c0_14, %c0_15] : memref<16x128xf32, #tpu.memory_space<vmem>>, vector<16x128xf32>
    tpu.vector_store %arg6[%c0_14, %c0_15], %30 {strides = array<i32>} : memref<16x128xf32, #tpu.memory_space<vmem>>, vector<16x128xf32>,
    return
  }
  func.func @transform_0(%arg0: i32) -> (i32, i32) {
    %c0_i32 = arith.constant 0 : i32
    %c0_i32_0 = arith.constant 0 : i32
    return %arg0, %c0_i32 : i32, i32
  }
  func.func @transform_1(%arg0: i32) -> (i32, i32) {
    %c0_i32 = arith.constant 0 : i32
    %c0_i32_0 = arith.constant 0 : i32
    %c0_i32_1 = arith.constant 0 : i32
    return %c0_i32, %c0_i32_0 : i32, i32
  }
  func.func @transform_2(%arg0: i32) -> (i32, i32) {
    %c0_i32 = arith.constant 0 : i32
    %c0_i32_0 = arith.constant 0 : i32
    %c0_i32_1 = arith.constant 0 : i32
    return %c0_i32, %c0_i32_0 : i32, i32
  }
  func.func @transform_3(%arg0: i32) -> (i32, i32) {
    %c0_i32 = arith.constant 0 : i32
    %c0_i32_0 = arith.constant 0 : i32
    %c0_i32_1 = arith.constant 0 : i32
    return %c0_i32, %c0_i32_0 : i32, i32
  }
  func.func @transform_4(%arg0: i32) -> (i32, i32) {
    %c0_i32 = arith.constant 0 : i32
    %c0_i32_0 = arith.constant 0 : i32
    %c0_i32_1 = arith.constant 0 : i32
    return %c0_i32, %c0_i32_0 : i32, i32
  }
  func.func @transform_5(%arg0: i32) -> (i32, i32) {
    %c0_i32 = arith.constant 0 : i32
    %c0_i32_0 = arith.constant 0 : i32
    return %arg0, %c0_i32 : i32, i32
  }
}

</mosaic_0001>

<llo_original>
// kernel: tpu_custom_call.1
$region0: #{tpu_custom_call.1}
  #allocation0 [shape = 'u32[]', space=smem, size = 0x4, offset = 0x4, fixed_abs, tag = 'smem constant byte address 0x4 - core index']
  #allocation1 [shape = 'u32[144,128]{1,0:T(1,128)}', space=vmem, size = 0x12000, scoped, tag = 'internal scratch']
  %s0 = inlined_call_operand.hbm [shape: f32[16,128], index: 0, kind: input, shape index: {}]
  %s1 = inlined_call_operand.vmem [shape: f32[1,128], index: 1, kind: input, shape index: {}]
  %s2 = inlined_call_operand.vmem [shape: f32[1,128], index: 2, kind: input, shape index: {}]
  %s3 = inlined_call_operand.hbm [shape: bf16[128,128], index: 3, kind: input, shape index: {}]
  %s4 = inlined_call_operand.vmem [shape: f32[1,128], index: 4, kind: input, shape index: {}]
  %s5 = inlined_call_operand.hbm [shape: f32[16,128], index: 5, kind: output, shape index: {}]
  %s6 = sld [smem:[#allocation0]]
  $region38: #{tpu_custom_call.1} parent=0
    _
  %s8 = ssub.s32 1, %s6
  %s9 = scalar_select 0, %s8, %s6
  $region1: #{tpu_custom_call.1} parent=0
    #allocation2 [shape = 'u8[8192]{0}', space=vmem, size = 0x2000, scoped, tag = 'input window, operand 0, single buffered']
    #allocation3 [shape = 's32[1]{0}', space=sflag, size = 0x4, scoped, tag = 'scoped memory for tpu_custom_call.1']
    #allocation4 [shape = 's32[1]{0}', space=sflag, size = 0x4, scoped, tag = 'scoped memory for tpu_custom_call.1']
    #allocation5 [shape = 'u8[32768]{0}', space=vmem, size = 0x8000, scoped, tag = 'input window, operand 3, single buffered']
    #allocation6 [shape = 's32[1]{0}', space=sflag, size = 0x4, scoped, tag = 'scoped memory for tpu_custom_call.1']
    #allocation7 [shape = 'u8[8192]{0}', space=vmem, size = 0x2000, scoped, tag = 'output window, operand 0, single buffered']
    %10 = vsyncpa [#allocation3], 0
    %11 = vsyncpa [#allocation6], 0
    %12 = vsyncpa [#allocation4], 0
    // Predicated region
    $region2: #{tpu_custom_call.1} parent=1 // pred_check
      _
    $region3: #{tpu_custom_call.1} parent=1 // pred_check_branch
      %14 = sbr.rel (0) target = $region5
    $region4: #{tpu_custom_call.1} parent=1 // pred_region
      %s16 = ssub.s32 256, 256
      %17 = vsyncadd [#allocation3], %s16
      %s18 = sshll.u32 [#allocation2], 4
      %s19 = int_to_ptr.vmem [resolvable:$true] %s18
      %24 = dma.hbm_to_vmem [thread:$0]  %s0, 256, %s19, [#allocation3], 128, 128, 8
    $region5: #{tpu_custom_call.1} parent=1 // pred_fallthru
      _
    // Predicated region
    $region6: #{tpu_custom_call.1} parent=1 // pred_check
      _
    $region7: #{tpu_custom_call.1} parent=1 // pred_check_branch
      %26 = sbr.rel (0) target = $region9
    $region8: #{tpu_custom_call.1} parent=1 // pred_region
      _
    $region9: #{tpu_custom_call.1} parent=1 // pred_fallthru
      _
    // Predicated region
    $region10: #{tpu_custom_call.1} parent=1 // pred_check
      _
    $region11: #{tpu_custom_call.1} parent=1 // pred_check_branch
      %28 = sbr.rel (0) target = $region13
    $region12: #{tpu_custom_call.1} parent=1 // pred_region
      _
    $region13: #{tpu_custom_call.1} parent=1 // pred_fallthru
      _
    // Predicated region
    $region14: #{tpu_custom_call.1} parent=1 // pred_check
      _
    $region15: #{tpu_custom_call.1} parent=1 // pred_check_branch
      %30 = sbr.rel (0) target = $region17
    $region16: #{tpu_custom_call.1} parent=1 // pred_region
      %s32 = ssub.s32 1024, 1024
      %33 = vsyncadd [#allocation6], %s32
      %s34 = sshll.u32 [#allocation5], 4
      %s35 = int_to_ptr.vmem [resolvable:$true] %s34
      %40 = dma.hbm_to_vmem [thread:$0]  %s3, 1024, %s35, [#allocation6], 64, 64, 4
    $region17: #{tpu_custom_call.1} parent=1 // pred_fallthru
      _
    // Predicated region
    $region18: #{tpu_custom_call.1} parent=1 // pred_check
      _
    $region19: #{tpu_custom_call.1} parent=1 // pred_check_branch
      %42 = sbr.rel (0) target = $region21
    $region20: #{tpu_custom_call.1} parent=1 // pred_region
      _
    $region21: #{tpu_custom_call.1} parent=1 // pred_fallthru
      _
    // Predicated region
    $region22: #{tpu_custom_call.1} parent=1 // pred_check
      _
    $region23: #{tpu_custom_call.1} parent=1 // pred_check_branch
      %44 = sbr.rel (0) target = $region25
    $region24: #{tpu_custom_call.1} parent=1 // pred_region
      %45 = dma.done [#allocation3], 256
    $region25: #{tpu_custom_call.1} parent=1 // pred_fallthru
      _
    // Predicated region
    $region26: #{tpu_custom_call.1} parent=1 // pred_check
      _
    $region27: #{tpu_custom_call.1} parent=1 // pred_check_branch
      %47 = sbr.rel (0) target = $region29
    $region28: #{tpu_custom_call.1} parent=1 // pred_region
      %48 = dma.done [#allocation6], 1024
    $region29: #{tpu_custom_call.1} parent=1 // pred_fallthru
      _
    %v50 = vld [vmem:[#allocation2] sm:$0xff]
    %v51 = vld [vmem:[#allocation2 + $0x8] sm:$0xff]
    %52 = vadd.xlane.f32.xlu0 %v50
    %v53 = vpop.xlane.xlu0 %52
    %54 = vadd.xlane.f32.xlu0 %v51
    %v55 = vpop.xlane.xlu0 %54
    %v56 = vrcp.pop 128.0
    %v57 = vmul.f32 %v53, %v56
    %v58 = vmul.f32 %v55, %v56
    %v59 = vmul.f32 %v50, %v50
    %v60 = vmul.f32 %v51, %v51
    %61 = vadd.xlane.f32.xlu0 %v59
    %v62 = vpop.xlane.xlu0 %61
    %63 = vadd.xlane.f32.xlu0 %v60
    %v64 = vpop.xlane.xlu0 %63
    %v65 = vmul.f32 %v62, %v56
    %v66 = vmul.f32 %v64, %v56
    %v67 = vmul.f32 %v57, %v57
    %v68 = vmul.f32 %v58, %v58
    %v69 = vsub.f32 %v65, %v67
    %v70 = vsub.f32 %v66, %v68
    %v71 = vadd.f32 %v69, 1e-05
    %v72 = vadd.f32 %v70, 1e-05
    %v73 = vrsqrt.pop %v71
    %v74 = vrsqrt.pop %v72
    %v75 = vsub.f32 %v50, %v57
    %v76 = vsub.f32 %v51, %v58
    %v77 = vmul.f32 %v75, %v73
    %v78 = vmul.f32 %v76, %v74
    %v79 = vld [vmem:[%s1] sm:$0x1]
    %v81 = vlaneseq
    %v82 = vshrl.u32 %v81, 7
    %v83 = vsub.s32 0, %v82
    %v84 = vrot.slane %v79, %v83
    %v86 = vmul.f32 %v77, %v84
    %v87 = vmul.f32 %v78, %v84
    %v88 = vld [vmem:[%s2] sm:$0x1]
    %v90 = vlaneseq
    %v91 = vshrl.u32 %v90, 7
    %v92 = vsub.s32 0, %v91
    %v93 = vrot.slane %v88, %v92
    %v95 = vadd.f32 %v86, %v93
    %v96 = vadd.f32 %v87, %v93
    %v97 = vpack.c.bf16 %v96, %v95
    %v98 = vld [vmem:[#allocation5] sm:$0xf]
    %v99 = vld [vmem:[#allocation5 + $0x4] sm:$0xf]
    %v100 = vld [vmem:[#allocation5 + $0x8] sm:$0xf]
    %v101 = vld [vmem:[#allocation5 + $0xc] sm:$0xf]
    %v102 = vld [vmem:[#allocation5 + $0x10] sm:$0xf]
    %v103 = vld [vmem:[#allocation5 + $0x14] sm:$0xf]
    %v104 = vld [vmem:[#allocation5 + $0x18] sm:$0xf]
    %v105 = vld [vmem:[#allocation5 + $0x1c] sm:$0xf]
    %v106 = vld [vmem:[#allocation5 + $0x20] sm:$0xf]
    %v107 = vld [vmem:[#allocation5 + $0x24] sm:$0xf]
    %v108 = vld [vmem:[#allocation5 + $0x28] sm:$0xf]
    %v109 = vld [vmem:[#allocation5 + $0x2c] sm:$0xf]
    %v110 = vld [vmem:[#allocation5 + $0x30] sm:$0xf]
    %v111 = vld [vmem:[#allocation5 + $0x34] sm:$0xf]
    %v112 = vld [vmem:[#allocation5 + $0x38] sm:$0xf]
    %v113 = vld [vmem:[#allocation5 + $0x3c] sm:$0xf]
    %v114 = vld [vmem:[%s4] sm:$0x1]
    %v116 = vlaneseq
    %v117 = vshrl.u32 %v116, 7
    %v118 = vsub.s32 0, %v117
    %v119 = vrot.slane %v114, %v118
    %v137 = vunpack.c.l.b16 %v98
    %v138 = vunpack.c.l.b16 %v99
    %v139 = vunpack.c.l.b16 %v100
    %v140 = vunpack.c.l.b16 %v101
    %v141 = vunpack.c.l.b16 %v102
    %v142 = vunpack.c.l.b16 %v103
    %v143 = vunpack.c.l.b16 %v104
    %v144 = vunpack.c.l.b16 %v105
    %v145 = vunpack.c.l.b16 %v106
    %v146 = vunpack.c.l.b16 %v107
    %v147 = vunpack.c.l.b16 %v108
    %v148 = vunpack.c.l.b16 %v109
    %v149 = vunpack.c.l.b16 %v110
    %v150 = vunpack.c.l.b16 %v111
    %v151 = vunpack.c.l.b16 %v112
    %v152 = vunpack.c.l.b16 %v113
    %v153 = vpack.c.b16 %v138, %v137
    %v154 = vpack.c.b16 %v140, %v139
    %v155 = vpack.c.b16 %v142, %v141
    %v156 = vpack.c.b16 %v144, %v143
    %v157 = vpack.c.b16 %v146, %v145
    %v158 = vpack.c.b16 %v148, %v147
    %v159 = vpack.c.b16 %v150, %v149
    %v160 = vpack.c.b16 %v152, %v151
    %169 = vmatprep.subr.bf16.mxu0 0
    %170 = vmatpush1.bf16.msra.mxu0 %v153
    %171 = vmatprep.subr.bf16.mxu0 0
    %172 = vmatpush1.bf16.msra.mxu0 %v154
    %173 = vmatprep.subr.bf16.mxu0 0
    %174 = vmatpush1.bf16.msra.mxu0 %v155
    %175 = vmatprep.subr.bf16.mxu0 0
    %176 = vmatpush1.bf16.msra.mxu0 %v156
    %177 = vmatprep.subr.bf16.mxu0 0
    %178 = vmatpush1.bf16.msra.mxu0 %v157
    %179 = vmatprep.subr.bf16.mxu0 0
    %180 = vmatpush1.bf16.msra.mxu0 %v158
    %181 = vmatprep.subr.bf16.mxu0 0
    %182 = vmatpush1.bf16.msra.mxu0 %v159
    %183 = vmatprep.subr.bf16.mxu0 0
    %184 = vmatpush1.bf16.msra.mxu0 %v160
    %185 = vmatprep.subr.bf16.mxu0 0
    %186 = vmatpush1.bf16.msra.mxu0 0
    %187 = vmatprep.subr.bf16.mxu0 0
    %188 = vmatpush1.bf16.msra.mxu0 0
    %189 = vmatprep.subr.bf16.mxu0 0
    %190 = vmatpush1.bf16.msra.mxu0 0
    %191 = vmatprep.subr.bf16.mxu0 0
    %192 = vmatpush1.bf16.msra.mxu0 0
    %193 = vmatprep.subr.bf16.mxu0 0
    %194 = vmatpush1.bf16.msra.mxu0 0
    %195 = vmatprep.subr.bf16.mxu0 0
    %196 = vmatpush1.bf16.msra.mxu0 0
    %197 = vmatprep.subr.bf16.mxu0 0
    %198 = vmatpush1.bf16.msra.mxu0 0
    %199 = vmatprep.subr.bf16.mxu0 0
    %200 = vmatpush1.bf16.msra.mxu0 0
    %201 = vmatprep.mubr.bf16.mxu0 0
    %202 = vmatmul.mubr.bf16.gmra.mrb[0].mxu0 %v97
    %v203 = vpop.f32.mrb[0].mxu0
    %v204 = vadd.f32 %v119, %v203
    %v205 = vpop.f32.mrb[0].mxu0
    %v206 = vpop.f32.mrb[0].mxu0
    %v207 = vadd.f32 %v119, %v206
    %v208 = vpop.f32.mrb[0].mxu0
    %209 = vdwg.mxu0
    %210 = vst [vmem:[#allocation7] sm:$0xff] %v204
    %211 = vst [vmem:[#allocation7 + $0x8] sm:$0xff] %v207
    // Predicated region
    $region30: #{tpu_custom_call.1} parent=1 // pred_check
      _
    $region31: #{tpu_custom_call.1} parent=1 // pred_check_branch
      %213 = sbr.rel (0) target = $region33
    $region32: #{tpu_custom_call.1} parent=1 // pred_region
      %s215 = ssub.s32 256, 256
      %216 = vsyncadd [#allocation4], %s215
      %s217 = sshll.u32 [#allocation7], 4
      %s218 = int_to_ptr.vmem [resolvable:$true] %s217
      %223 = dma.vmem_to_hbm [thread:$0]  %s218, 256, %s5, [#allocation4], 128, 128, 8
    $region33: #{tpu_custom_call.1} parent=1 // pred_fallthru
      _
    // Predicated region
    $region34: #{tpu_custom_call.1} parent=1 // pred_check
      _
    $region35: #{tpu_custom_call.1} parent=1 // pred_check_branch
      %225 = sbr.rel (0) target = $region37
    $region36: #{tpu_custom_call.1} parent=1 // pred_region
      %226 = dma.done [#allocation4], 256
    $region37: #{tpu_custom_call.1} parent=1 // pred_fallthru
      _
    %227 = vsyncpa [#allocation3], 1
    %228 = vsyncpa [#allocation6], 1
    %229 = vsyncpa [#allocation4], 1

</llo_original>
